<compile_context>
chip_gen: v6e
topology: v6e:2x2x1
jax: 0.10.0
libtpu: 0.0.40
codegen_flags: <defaults>
</compile_context>

<pallas_src>
import functools
import math

import jax
import jax.numpy as jnp
from jax.experimental import pallas as pl
from jax.experimental.pallas import tpu as pltpu


_VMEM_LIMIT_BYTES = 48 * 1024 * 1024   # well above ~16 MB worst-case use, below v7x physical


def _round_up(x, m):
    return ((x + m - 1) // m) * m


def _rbf_kernel_nr(dist_ref, mu_ref, out_ref, *, sqrt_gamma, num_radial):
    # dist_ref: (1, TILE) f32      -- raw distances on the lane axis
    # mu_ref:   (R_pad, 1) f32     -- sqrt(gamma) * mu on the sublane axis
    # out_ref:  (TILE, num_radial) -- torch-layout output block
    d = dist_ref[...] * sqrt_gamma            # (1, TILE): row-only scale (cheap)
    diff = d - mu_ref[...]                    # (R_pad, TILE) lane-dense
    vals = jnp.exp(-(diff * diff))            # (R_pad, TILE) f32
    # Per-tile transpose on the idle XLU: avoids a separate XLA transpose pass
    # over the 80*N-byte output.  R_pad is a multiple of 8, TILE of 128.
    vals_t = jnp.transpose(vals, (1, 0))      # (TILE, R_pad)
    out_ref[...] = vals_t[:, :num_radial].astype(out_ref.dtype)


def _rbf_kernel_rn(dist_ref, mu_ref, out_ref, *, sqrt_gamma):
    # dist_ref: (1, TILE); mu_ref: (R, 1); out_ref: (R, TILE) fully lane-dense
    d = dist_ref[...] * sqrt_gamma
    diff = d - mu_ref[...]
    out_ref[...] = jnp.exp(-(diff * diff)).astype(out_ref.dtype)


def gaussian_rbf(dist, mu, gamma, *, tile_lanes=32768, out_dtype=jnp.float32,
                 layout="nr"):
    """Gaussian RBF expansion of distances.

    dist: any shape (flattened like torch .view(-1, 1)); mu: (num_radial,).
    layout="nr" -> (N, num_radial) (torch semantics, default).
    layout="rn" -> (num_radial, N) lane-dense slab (fastest; fuse downstream).
    """
    dist_flat = jnp.reshape(dist, (-1,)).astype(jnp.float32)
    n = int(dist_flat.shape[0])
    num_radial = int(mu.shape[0])
    sqrt_gamma = float(math.sqrt(float(gamma)))

    # --- tile / grid derivation: bounded padding, even #steps for v7x -------
    n128 = _round_up(max(n, 1), 128)
    steps = max(1, pl.cdiv(n128, int(tile_lanes)))
    if n128 > 128:
        steps = _round_up(steps, 2)            # even => both v7x TCs get work
    tile = _round_up(pl.cdiv(n128, steps), 128)
    n_pad = steps * tile

    # One cheap XLA pad on the small (4 B/elem) input; output is never re-padded.
    dist_row = jnp.pad(dist_flat, (0, n_pad - n)).reshape(1, n_pad)
    mu_scaled = mu.astype(jnp.float32) * sqrt_gamma

    compiler_params = pltpu.CompilerParams(
        dimension_semantics=("parallel",),
        vmem_limit_bytes=_VMEM_LIMIT_BYTES,
    )

    if layout == "rn":
        mu_col = mu_scaled.reshape(num_radial, 1)
        out = pl.pallas_call(
            functools.partial(_rbf_kernel_rn, sqrt_gamma=sqrt_gamma),
            out_shape=jax.ShapeDtypeStruct((num_radial, n_pad), out_dtype),
            grid_spec=pltpu.PrefetchScalarGridSpec(
                num_scalar_prefetch=0,
                grid=(steps,),
                in_specs=[
                    pl.BlockSpec((1, tile), lambda i: (0, i)),          # dist row
                    pl.BlockSpec((num_radial, 1), lambda i: (0, 0)),    # mu (resident)
                ],
                out_specs=pl.BlockSpec((num_radial, tile), lambda i: (0, i)),
            ),
            compiler_params=compiler_params,
        )(dist_row, mu_col)
        return out if n == n_pad else out[:, :n]

    # layout == "nr" (torch (N, num_radial) semantics; in-kernel transpose)
    r_pad = _round_up(num_radial, 8)           # align sublanes for the XLU transpose
    mu_col = jnp.pad(mu_scaled, (0, r_pad - num_radial)).reshape(r_pad, 1)
    out = pl.pallas_call(
        functools.partial(_rbf_kernel_nr, sqrt_gamma=sqrt_gamma,
                          num_radial=num_radial),
        out_shape=jax.ShapeDtypeStruct((n_pad, num_radial), out_dtype),
        grid_spec=pltpu.PrefetchScalarGridSpec(
            num_scalar_prefetch=0,
            grid=(steps,),
            in_specs=[
                pl.BlockSpec((1, tile), lambda i: (0, i)),              # dist row
                pl.BlockSpec((r_pad, 1), lambda i: (0, 0)),             # mu (resident)
            ],
            out_specs=pl.BlockSpec((tile, num_radial), lambda i: (i, 0)),
        ),
        compiler_params=compiler_params,
    )(dist_row, mu_col)
    # Prefix row-slice only when N is not tile-aligned (no transpose pass).
    return out if n == n_pad else out[:n]


class GaussianRBFJax:
    """Concrete RadialBasis: Gaussian RBF expansion.

    # TODO(synk): RadialBasis.forward is abstract in the torch spec; the
    # standard Gaussian smearing basis is implemented as the concrete forward.
    """

    def __init__(self, start=0.0, stop=10.0, num_radial=20,
                 out_dtype=jnp.float32):
        assert start >= 0.0
        assert start < stop
        self.num_radial = num_radial
        self.mu = jnp.linspace(start, stop, num_radial, dtype=jnp.float32)
        step = (stop - start) / (num_radial - 1)
        self.gamma = 0.5 / step ** 2
        self.out_dtype = out_dtype

    def __call__(self, dist, layout="nr"):
        return gaussian_rbf(dist, self.mu, self.gamma,
                            out_dtype=self.out_dtype, layout=layout)


def _reference(dist, mu, gamma):
    d = jnp.reshape(dist, (-1, 1)) - jnp.reshape(mu, (1, -1))
    return jnp.exp(-gamma * d ** 2)


if __name__ == "__main__":
    key = jax.random.PRNGKey(0)
    # dist: [..., 1] Euclidean distances, e.g. (batch=2, seq=8, 1) -> N=16
    dist = jax.random.uniform(key, (2, 8, 1), jnp.float32, minval=0.0, maxval=10.0)

    rbf = GaussianRBFJax(start=0.0, stop=10.0, num_radial=20)

    out = jax.block_until_ready(rbf(dist))                              # (16, 20)
    out_rn = jax.block_until_ready(
        gaussian_rbf(dist, rbf.mu, rbf.gamma, layout="rn"))             # (20, 16)

    ref = _reference(dist, rbf.mu, rbf.gamma)
    assert out.shape == (16, 20), out.shape
    assert out_rn.shape == (20, 16), out_rn.shape
    assert jnp.allclose(out, ref, atol=2e-5, rtol=2e-5), "nr mismatch vs reference"
    assert jnp.allclose(out_rn.T, ref, atol=2e-5, rtol=2e-5), "rn mismatch vs reference"
    print("KERNEL_OK")
</pallas_src>

<mosaic_0001>
module attributes {stable_mosaic.version = 11 : i64} {
  func.func @_rbf_kernel_nr(%arg0: i32, %arg1: memref<1x128xf32, #tpu.memory_space<vmem>>, %arg2: memref<24x1xf32, #tpu.memory_space<vmem>>, %arg3: memref<128x20xf32, #tpu.memory_space<vmem>>) attributes {dimension_semantics = [#tpu.dimension_semantics<parallel>], iteration_bounds = array<i64: 1>, scalar_prefetch = 0 : i64, scratch_operands = 0 : i64, tpu.core_type = #tpu.core_type<tc>, window_params = [{transform_indices = @transform_0, window_bounds = array<i64: 1, 128>}, {pipeline_mode = #tpu.pipeline_mode<synchronous>, transform_indices = @transform_1, window_bounds = array<i64: 24, 1>}, {transform_indices = @transform_2, window_bounds = array<i64: 128, 20>}]} {
    %c0 = arith.constant 0 : index
    %c0_0 = arith.constant 0 : index
    %0 = vector.load %arg1[%c0, %c0_0] : memref<1x128xf32, #tpu.memory_space<vmem>>, vector<1x128xf32>
    %cst = arith.constant 1.34350288 : f32
    %1 = vector.broadcast %cst : f32 to vector<1x128xf32>
    %2 = arith.mulf %0, %1 : vector<1x128xf32>
    %c0_1 = arith.constant 0 : index
    %c0_2 = arith.constant 0 : index
    %3 = vector.load %arg2[%c0_1, %c0_2] : memref<24x1xf32, #tpu.memory_space<vmem>>, vector<24x1xf32>
    %4 = vector.broadcast %2 : vector<1x128xf32> to vector<24x128xf32>
    %5 = vector.broadcast %3 : vector<24x1xf32> to vector<24x128xf32>
    %6 = arith.subf %4, %5 : vector<24x128xf32>
    %7 = arith.mulf %6, %6 : vector<24x128xf32>
    %cst_3 = arith.constant 0.000000e+00 : f32
    %8 = vector.broadcast %cst_3 : f32 to vector<24x128xf32>
    %9 = arith.subf %8, %7 : vector<24x128xf32>
    %10 = math.exp %9 : vector<24x128xf32>
    %11 = tpu.transpose %10, [1, 0] : vector<24x128xf32> -> vector<128x24xf32>
    %12 = vector.extract_strided_slice %11 {offsets = [0, 0], sizes = [128, 20], strides = [1, 1]} : vector<128x24xf32> to vector<128x20xf32>
    %c0_4 = arith.constant 0 : index
    %c0_5 = arith.constant 0 : index
    %13 = vector.load %arg3[%c0_4, %c0_5] : memref<128x20xf32, #tpu.memory_space<vmem>>, vector<128x20xf32>
    tpu.vector_store %arg3[%c0_4, %c0_5], %12 {strides = array<i32>} : memref<128x20xf32, #tpu.memory_space<vmem>>, vector<128x20xf32>,
    return
  }
  func.func @transform_0(%arg0: i32) -> (i32, i32) {
    %c0_i32 = arith.constant 0 : i32
    %c0_i32_0 = arith.constant 0 : i32
    return %c0_i32, %arg0 : i32, i32
  }
  func.func @transform_1(%arg0: i32) -> (i32, i32) {
    %c0_i32 = arith.constant 0 : i32
    %c0_i32_0 = arith.constant 0 : i32
    %c0_i32_1 = arith.constant 0 : i32
    return %c0_i32, %c0_i32_0 : i32, i32
  }
  func.func @transform_2(%arg0: i32) -> (i32, i32) {
    %c0_i32 = arith.constant 0 : i32
    %c0_i32_0 = arith.constant 0 : i32
    return %arg0, %c0_i32 : i32, i32
  }
}

</mosaic_0001>

<llo_original>
// kernel: tpu_custom_call.1
$region0: #{tpu_custom_call.1}
  #allocation0 [shape = 'u32[]', space=smem, size = 0x4, offset = 0x4, fixed_abs, tag = 'smem constant byte address 0x4 - core index']
  #allocation1 [shape = 'u32[144,128]{1,0:T(1,128)}', space=vmem, size = 0x12000, scoped, tag = 'internal scratch']
  %s0 = inlined_call_operand.vmem [shape: f32[1,128], index: 0, kind: input, shape index: {}]
  %s1 = inlined_call_operand.vmem [shape: f32[24,1], index: 1, kind: input, shape index: {}]
  %s2 = inlined_call_operand.vmem [shape: f32[128,20], index: 2, kind: output, shape index: {}]
  %s3 = sld [smem:[#allocation0]]
  $region18: #{tpu_custom_call.1} parent=0
    _
  %s5 = ssub.s32 1, %s3
  %s6 = scalar_select 0, %s5, %s3
  // Predicated region
  $region2: #{tpu_custom_call.1} parent=0 // pred_check
    _
  $region3: #{tpu_custom_call.1} parent=0 // pred_check_branch
    %8 = sbr.rel (0) target = $region5
  $region4: #{tpu_custom_call.1} parent=0 // pred_region
    _
  $region5: #{tpu_custom_call.1} parent=0 // pred_fallthru
    _
  // Predicated region
  $region6: #{tpu_custom_call.1} parent=0 // pred_check
    _
  $region7: #{tpu_custom_call.1} parent=0 // pred_check_branch
    %10 = sbr.rel (0) target = $region9
  $region8: #{tpu_custom_call.1} parent=0 // pred_region
    _
  $region9: #{tpu_custom_call.1} parent=0 // pred_fallthru
    _
  %v11 = vld [vmem:[%s0] sm:$0x1]
  %v12 = vmul.f32 %v11, 1.3435029
  %v13 = vld [vmem:[%s1] sm:$0xff]
  %v14 = vld [vmem:[%s1 + $0x8] sm:$0xff]
  %v15 = vld [vmem:[%s1 + $0x10] sm:$0xff]
  %v17 = vlaneseq
  %v18 = vshrl.u32 %v17, 7
  %v19 = vsub.s32 0, %v18
  %v20 = vrot.slane %v12, %v19
  %23 = vset.pattern.permute.xlu0 0
  %24 = vperm.xlu0 %23, %v13
  %v25 = vpop.permute.xlu0 %24
  %28 = vset.pattern.permute.xlu0 0
  %29 = vperm.xlu0 %28, %v14
  %v30 = vpop.permute.xlu0 %29
  %33 = vset.pattern.permute.xlu0 0
  %34 = vperm.xlu0 %33, %v15
  %v35 = vpop.permute.xlu0 %34
  %v37 = vsub.f32 %v20, %v25
  %v38 = vsub.f32 %v20, %v30
  %v39 = vsub.f32 %v20, %v35
  %v40 = vmul.f32 %v37, %v37
  %v41 = vmul.f32 %v38, %v38
  %v42 = vmul.f32 %v39, %v39
  %v43 = vsub.f32 0.0, %v40
  %v44 = vsub.f32 0.0, %v41
  %v45 = vsub.f32 0.0, %v42
  %v46 = vmul.f32 %v43, 1.442695
  %v47 = vpow.pop %v46
  %v48 = vmul.f32 %v44, 1.442695
  %v49 = vpow.pop %v48
  %v50 = vmul.f32 %v45, 1.442695
  %v51 = vpow.pop %v50
  %52 = vxpose.xlu0.b32.start [1/16] %v47, 128
  %53 = vxpose.xlu0.b32.cont [2/16] %v49, 128
  %54 = vxpose.xlu0.b32.cont [3/16] %v51, 128
  %55 = vxpose.xlu0.b32.cont [4/16] 0.0, 128
  %56 = vxpose.xlu0.b32.cont [5/16] 0.0, 128
  %57 = vxpose.xlu0.b32.cont [6/16] 0.0, 128
  %58 = vxpose.xlu0.b32.cont [7/16] 0.0, 128
  %59 = vxpose.xlu0.b32.cont [8/16] 0.0, 128
  %60 = vxpose.xlu0.b32.cont [9/16] 0.0, 128
  %61 = vxpose.xlu0.b32.cont [10/16] 0.0, 128
  %62 = vxpose.xlu0.b32.cont [11/16] 0.0, 128
  %63 = vxpose.xlu0.b32.cont [12/16] 0.0, 128
  %64 = vxpose.xlu0.b32.cont [13/16] 0.0, 128
  %65 = vxpose.xlu0.b32.cont [14/16] 0.0, 128
  %66 = vxpose.xlu0.b32.cont [15/16] 0.0, 128
  %67 = vxpose.xlu0.b32.end [16/16] 0.0, 128
  %v68 = vpop.trf.xlu0
  %v69 = vpop.trf.xlu0
  %v70 = vpop.trf.xlu0
  %v71 = vpop.trf.xlu0
  %v72 = vpop.trf.xlu0
  %v73 = vpop.trf.xlu0
  %v74 = vpop.trf.xlu0
  %v75 = vpop.trf.xlu0
  %v76 = vpop.trf.xlu0
  %v77 = vpop.trf.xlu0
  %v78 = vpop.trf.xlu0
  %v79 = vpop.trf.xlu0
  %v80 = vpop.trf.xlu0
  %v81 = vpop.trf.xlu0
  %v82 = vpop.trf.xlu0
  %v83 = vpop.trf.xlu0
  %vm84 = vcmask 162816
  %85 = vst.msk [vmem:[%s2] sm:$0xff] %vm84, %v68
  %86 = vst.msk [vmem:[%s2 + $0x8] sm:$0xff] %vm84, %v69
  %87 = vst.msk [vmem:[%s2 + $0x10] sm:$0xff] %vm84, %v70
  %88 = vst.msk [vmem:[%s2 + $0x18] sm:$0xff] %vm84, %v71
  %89 = vst.msk [vmem:[%s2 + $0x20] sm:$0xff] %vm84, %v72
  %90 = vst.msk [vmem:[%s2 + $0x28] sm:$0xff] %vm84, %v73
  %91 = vst.msk [vmem:[%s2 + $0x30] sm:$0xff] %vm84, %v74
  %92 = vst.msk [vmem:[%s2 + $0x38] sm:$0xff] %vm84, %v75
  %93 = vst.msk [vmem:[%s2 + $0x40] sm:$0xff] %vm84, %v76
  %94 = vst.msk [vmem:[%s2 + $0x48] sm:$0xff] %vm84, %v77
  %95 = vst.msk [vmem:[%s2 + $0x50] sm:$0xff] %vm84, %v78
  %96 = vst.msk [vmem:[%s2 + $0x58] sm:$0xff] %vm84, %v79
  %97 = vst.msk [vmem:[%s2 + $0x60] sm:$0xff] %vm84, %v80
  %98 = vst.msk [vmem:[%s2 + $0x68] sm:$0xff] %vm84, %v81
  %99 = vst.msk [vmem:[%s2 + $0x70] sm:$0xff] %vm84, %v82
  %100 = vst.msk [vmem:[%s2 + $0x78] sm:$0xff] %vm84, %v83
  // Predicated region
  $region10: #{tpu_custom_call.1} parent=0 // pred_check
    _
  $region11: #{tpu_custom_call.1} parent=0 // pred_check_branch
    %102 = sbr.rel (0) target = $region13
  $region12: #{tpu_custom_call.1} parent=0 // pred_region
    _
  $region13: #{tpu_custom_call.1} parent=0 // pred_fallthru
    _
  // Predicated region
  $region14: #{tpu_custom_call.1} parent=0 // pred_check
    _
  $region15: #{tpu_custom_call.1} parent=0 // pred_check_branch
    %104 = sbr.rel (0) target = $region17
  $region16: #{tpu_custom_call.1} parent=0 // pred_region
    _
  $region17: #{tpu_custom_call.1} parent=0 // pred_fallthru
    _

</llo_original>
